<compile_context>
chip_gen: v5e
topology: v5e:2x2
jax: 0.10.0
libtpu: 0.0.40
codegen_flags: <defaults>
</compile_context>

<pallas_src>
import jax
import jax.numpy as jnp
from jax.experimental import pallas as pl
from jax.experimental.pallas import tpu as pltpu


def _round_up(n: int, m: int) -> int:
    return ((n + m - 1) // m) * m


def basenet_kernel(x_ref, w1_ref, b1_ref, w2_ref, b2_ref, o_ref, acc_ref):
    """Fused forward over grid (batch_tiles, k_tiles).

    x_ref : [TB, TK]      bf16 flattened-input tile
    w1_ref: [TK, Hd]      bf16 feature-extractor weight tile (K chunk)
    b1_ref: [1, Hd]       f32 feature-extractor bias
    w2_ref: [Hd, C_pad]   bf16 classifier weight (lane-padded)
    b2_ref: [1, C_pad]    f32 classifier bias (lane-padded)
    o_ref : [TB, C_pad]   f32 logits (lane-dense, padded)
    acc_ref: [TB, Hd]     f32 VMEM accumulator for the first matmul
    """
    k = pl.program_id(1)

    @pl.when(k == 0)
    def _init():
        acc_ref[...] = jnp.zeros_like(acc_ref)

    # feature_extractor matmul: accumulate K chunks in f32 on the MXU.
    acc_ref[...] += jnp.dot(
        x_ref[...], w1_ref[...], preferred_element_type=jnp.float32
    )

    @pl.when(k == pl.num_programs(1) - 1)
    def _finalize():
        # bias + ReLU in f32, then classifier matmul (bf16 operands, f32 acc).
        feat = jnp.maximum(acc_ref[...] + b1_ref[...], 0.0)
        logits = jnp.dot(
            feat.astype(w2_ref.dtype), w2_ref[...],
            preferred_element_type=jnp.float32,
        )
        o_ref[...] = (logits + b2_ref[...]).astype(o_ref.dtype)


def basenet_forward(x_nchw, w1, b1, w2, b2, *, tb=8, tk=256):
    B = x_nchw.shape[0]
    D, Hd = w1.shape
    C = w2.shape[1]

    # glue: flatten NCHW -> [B, D]
    x_flat = x_nchw.reshape(B, D)

    # --- pad to MXU/vreg-friendly shapes (zeros do not change the math) ---
    B_pad = _round_up(max(B, tb), tb)          # fill sublanes / MXU M dim
    if D >= tk:
        D_pad = _round_up(D, tk)
    else:
        D_pad = _round_up(max(D, 128), 128)
        tk = D_pad
    C_pad = _round_up(max(C, 128), 128)        # lane-dense output

    x_p = jnp.pad(x_flat, ((0, B_pad - B), (0, D_pad - D))).astype(jnp.bfloat16)
    w1_p = jnp.pad(w1, ((0, D_pad - D), (0, 0))).astype(jnp.bfloat16)
    w2_p = jnp.pad(w2, ((0, 0), (0, C_pad - C))).astype(jnp.bfloat16)
    b1_p = b1.astype(jnp.float32)
    b2_p = jnp.pad(b2, ((0, 0), (0, C_pad - C))).astype(jnp.float32)

    grid = (B_pad // tb, D_pad // tk)

    out = pl.pallas_call(
        basenet_kernel,
        out_shape=jax.ShapeDtypeStruct((B_pad, C_pad), jnp.float32),
        grid=grid,
        in_specs=[
            pl.BlockSpec((tb, tk), lambda i, k: (i, k)),      # x tile
            pl.BlockSpec((tk, Hd), lambda i, k: (k, 0)),      # W1 K-chunk
            pl.BlockSpec((1, Hd), lambda i, k: (0, 0)),       # b1
            pl.BlockSpec((Hd, C_pad), lambda i, k: (0, 0)),   # W2
            pl.BlockSpec((1, C_pad), lambda i, k: (0, 0)),    # b2
        ],
        out_specs=pl.BlockSpec((tb, C_pad), lambda i, k: (i, 0)),
        scratch_shapes=[pltpu.VMEM((tb, Hd), jnp.float32)],
        compiler_params=pltpu.CompilerParams(
            dimension_semantics=("parallel", "arbitrary"),
            vmem_limit_bytes=32 * 1024 * 1024,
        ),
    )(x_p, w1_p, b1_p, w2_p, b2_p)

    # strip padding back to the logical logits
    return out[:B, :C]


if __name__ == "__main__":
    # Small shapes consistent with an NCHW image classifier.
    B, C_in, H, W = 2, 4, 16, 16
    D_in = C_in * H * W          # 1024
    HIDDEN = 128
    N_CLASSES = 16

    key = jax.random.PRNGKey(0)
    kx, k1, k2, k3, k4 = jax.random.split(key, 5)

    x = jax.random.normal(kx, (B, C_in, H, W), dtype=jnp.float32)
    w1 = jax.random.normal(k1, (D_in, HIDDEN), dtype=jnp.float32) * 0.02
    b1 = jax.random.normal(k2, (1, HIDDEN), dtype=jnp.float32) * 0.01
    w2 = jax.random.normal(k3, (HIDDEN, N_CLASSES), dtype=jnp.float32) * 0.02
    b2 = jax.random.normal(k4, (1, N_CLASSES), dtype=jnp.float32) * 0.01

    out = basenet_forward(x, w1, b1, w2, b2)
    jax.block_until_ready(out)

    # Reference (pure JAX) using the same bf16 operand rounding the kernel
    # applies, with f32 accumulation — tight tolerance is valid against this.
    xb = x.reshape(B, D_in).astype(jnp.bfloat16).astype(jnp.float32)
    w1b = w1.astype(jnp.bfloat16).astype(jnp.float32)
    w2b = w2.astype(jnp.bfloat16).astype(jnp.float32)
    feat = jnp.maximum(xb @ w1b + b1, 0.0)
    ref = feat.astype(jnp.bfloat16).astype(jnp.float32) @ w2b + b2

    assert out.shape == (B, N_CLASSES)
    assert jnp.allclose(out, ref, atol=2e-3, rtol=2e-3), float(
        jnp.max(jnp.abs(out - ref))
    )

    # Looser sanity check against the full-f32 math (bf16 rounding of operands).
    ref_f32 = jnp.maximum(x.reshape(B, D_in) @ w1 + b1, 0.0) @ w2 + b2
    assert jnp.allclose(out, ref_f32, atol=5e-2, rtol=5e-2)

    print("KERNEL_OK")
</pallas_src>

<mosaic_0001>
module attributes {stable_mosaic.version = 11 : i64} {
  func.func @basenet_kernel(%arg0: i32, %arg1: i32, %arg2: memref<8x256xbf16, #tpu.memory_space<vmem>>, %arg3: memref<256x128xbf16, #tpu.memory_space<vmem>>, %arg4: memref<1x128xf32, #tpu.memory_space<vmem>>, %arg5: memref<128x128xbf16, #tpu.memory_space<vmem>>, %arg6: memref<1x128xf32, #tpu.memory_space<vmem>>, %arg7: memref<8x128xf32, #tpu.memory_space<vmem>>, %arg8: memref<8x128xf32, #tpu.memory_space<vmem>>) attributes {dimension_semantics = [#tpu.dimension_semantics<parallel>, #tpu.dimension_semantics<arbitrary>], iteration_bounds = array<i64: 1, 4>, scalar_prefetch = 0 : i64, scratch_operands = 1 : i64, tpu.core_type = #tpu.core_type<tc>, window_params = [{transform_indices = @transform_0, window_bounds = array<i64: 8, 256>}, {transform_indices = @transform_1, window_bounds = array<i64: 256, 128>}, {pipeline_mode = #tpu.pipeline_mode<synchronous>, transform_indices = @transform_2, window_bounds = array<i64: 1, 128>}, {pipeline_mode = #tpu.pipeline_mode<synchronous>, transform_indices = @transform_3, window_bounds = array<i64: 128, 128>}, {pipeline_mode = #tpu.pipeline_mode<synchronous>, transform_indices = @transform_4, window_bounds = array<i64: 1, 128>}, {transform_indices = @transform_5, window_bounds = array<i64: 8, 128>}]} {
    %c0_i32 = arith.constant 0 : i32
    %0 = arith.cmpi eq, %arg1, %c0_i32 : i32
    %1 = arith.extui %0 : i1 to i32
    %c0_i32_0 = arith.constant 0 : i32
    %2 = arith.cmpi ne, %1, %c0_i32_0 : i32
    scf.if %2 {
      %cst_9 = arith.constant 0.000000e+00 : f32
      %12 = vector.broadcast %cst_9 : f32 to vector<8x128xf32>
      %c0_10 = arith.constant 0 : index
      %c0_11 = arith.constant 0 : index
      %13 = vector.load %arg8[%c0_10, %c0_11] : memref<8x128xf32, #tpu.memory_space<vmem>>, vector<8x128xf32>
      tpu.vector_store %arg8[%c0_10, %c0_11], %12 {strides = array<i32>} : memref<8x128xf32, #tpu.memory_space<vmem>>, vector<8x128xf32>,
    } else {
    }
    %c0 = arith.constant 0 : index
    %c0_1 = arith.constant 0 : index
    %3 = vector.load %arg8[%c0, %c0_1] : memref<8x128xf32, #tpu.memory_space<vmem>>, vector<8x128xf32>
    %c0_2 = arith.constant 0 : index
    %c0_3 = arith.constant 0 : index
    %4 = vector.load %arg2[%c0_2, %c0_3] : memref<8x256xbf16, #tpu.memory_space<vmem>>, vector<8x256xbf16>
    %c0_4 = arith.constant 0 : index
    %c0_5 = arith.constant 0 : index
    %5 = vector.load %arg3[%c0_4, %c0_5] : memref<256x128xbf16, #tpu.memory_space<vmem>>, vector<256x128xbf16>
    %cst = arith.constant dense<0.000000e+00> : vector<8x128xf32>
    %6 = tpu.matmul %4, %5, %cst {dimension_numbers = #tpu.dot_dimension_numbers<[1], [0], [0], [1], [0, 0, 1, 1], [], []>} : vector<8x256xbf16>, vector<256x128xbf16>, vector<8x128xf32> -> vector<8x128xf32>
    %7 = arith.addf %3, %6 : vector<8x128xf32>
    %c0_6 = arith.constant 0 : index
    %c0_7 = arith.constant 0 : index
    %8 = vector.load %arg8[%c0_6, %c0_7] : memref<8x128xf32, #tpu.memory_space<vmem>>, vector<8x128xf32>
    tpu.vector_store %arg8[%c0_6, %c0_7], %7 {strides = array<i32>} : memref<8x128xf32, #tpu.memory_space<vmem>>, vector<8x128xf32>,
    %c3_i32 = arith.constant 3 : i32
    %9 = arith.cmpi eq, %arg1, %c3_i32 : i32
    %10 = arith.extui %9 : i1 to i32
    %c0_i32_8 = arith.constant 0 : i32
    %11 = arith.cmpi ne, %10, %c0_i32_8 : i32
    scf.if %11 {
      %c0_9 = arith.constant 0 : index
      %c0_10 = arith.constant 0 : index
      %12 = vector.load %arg8[%c0_9, %c0_10] : memref<8x128xf32, #tpu.memory_space<vmem>>, vector<8x128xf32>
      %c0_11 = arith.constant 0 : index
      %c0_12 = arith.constant 0 : index
      %13 = vector.load %arg4[%c0_11, %c0_12] : memref<1x128xf32, #tpu.memory_space<vmem>>, vector<1x128xf32>
      %14 = vector.broadcast %13 : vector<1x128xf32> to vector<8x128xf32>
      %15 = arith.addf %12, %14 : vector<8x128xf32>
      %cst_13 = arith.constant 0.000000e+00 : f32
      %16 = vector.broadcast %cst_13 : f32 to vector<8x128xf32>
      %17 = arith.maximumf %15, %16 : vector<8x128xf32>
      %18 = arith.truncf %17 : vector<8x128xf32> to vector<8x128xbf16>
      %c0_14 = arith.constant 0 : index
      %c0_15 = arith.constant 0 : index
      %19 = vector.load %arg5[%c0_14, %c0_15] : memref<128x128xbf16, #tpu.memory_space<vmem>>, vector<128x128xbf16>
      %cst_16 = arith.constant dense<0.000000e+00> : vector<8x128xf32>
      %20 = tpu.matmul %18, %19, %cst_16 {dimension_numbers = #tpu.dot_dimension_numbers<[1], [0], [0], [1], [0, 0, 1, 1], [], []>} : vector<8x128xbf16>, vector<128x128xbf16>, vector<8x128xf32> -> vector<8x128xf32>
      %c0_17 = arith.constant 0 : index
      %c0_18 = arith.constant 0 : index
      %21 = vector.load %arg6[%c0_17, %c0_18] : memref<1x128xf32, #tpu.memory_space<vmem>>, vector<1x128xf32>
      %22 = vector.broadcast %21 : vector<1x128xf32> to vector<8x128xf32>
      %23 = arith.addf %20, %22 : vector<8x128xf32>
      %c0_19 = arith.constant 0 : index
      %c0_20 = arith.constant 0 : index
      %24 = vector.load %arg7[%c0_19, %c0_20] : memref<8x128xf32, #tpu.memory_space<vmem>>, vector<8x128xf32>
      tpu.vector_store %arg7[%c0_19, %c0_20], %23 {strides = array<i32>} : memref<8x128xf32, #tpu.memory_space<vmem>>, vector<8x128xf32>,
    } else {
    }
    return
  }
  func.func @transform_0(%arg0: i32, %arg1: i32) -> (i32, i32) {
    %c0_i32 = arith.constant 0 : i32
    return %arg0, %arg1 : i32, i32
  }
  func.func @transform_1(%arg0: i32, %arg1: i32) -> (i32, i32) {
    %c0_i32 = arith.constant 0 : i32
    %c0_i32_0 = arith.constant 0 : i32
    return %arg1, %c0_i32 : i32, i32
  }
  func.func @transform_2(%arg0: i32, %arg1: i32) -> (i32, i32) {
    %c0_i32 = arith.constant 0 : i32
    %c0_i32_0 = arith.constant 0 : i32
    %c0_i32_1 = arith.constant 0 : i32
    return %c0_i32, %c0_i32_0 : i32, i32
  }
  func.func @transform_3(%arg0: i32, %arg1: i32) -> (i32, i32) {
    %c0_i32 = arith.constant 0 : i32
    %c0_i32_0 = arith.constant 0 : i32
    %c0_i32_1 = arith.constant 0 : i32
    return %c0_i32, %c0_i32_0 : i32, i32
  }
  func.func @transform_4(%arg0: i32, %arg1: i32) -> (i32, i32) {
    %c0_i32 = arith.constant 0 : i32
    %c0_i32_0 = arith.constant 0 : i32
    %c0_i32_1 = arith.constant 0 : i32
    return %c0_i32, %c0_i32_0 : i32, i32
  }
  func.func @transform_5(%arg0: i32, %arg1: i32) -> (i32, i32) {
    %c0_i32 = arith.constant 0 : i32
    %c0_i32_0 = arith.constant 0 : i32
    return %arg0, %c0_i32 : i32, i32
  }
}

</mosaic_0001>

<llo_original>
// kernel: tpu_custom_call.1
$region0: #{tpu_custom_call.1}
  #allocation0 [shape = 'u32[]', space=smem, size = 0x4, offset = 0x4, fixed_abs, tag = 'smem constant byte address 0x4 - core index']
  #allocation1 [shape = 'u32[72,128]{1,0:T(1,128)}', space=vmem, size = 0x9000, scoped, tag = 'internal scratch']
  #allocation2 [shape = 'f32[8,128]{1,0:T(8,128)}', space=vmem, size = 0x1000, scoped, tag = 'scratch operand']
  %s0 = inlined_call_operand.hbm [shape: bf16[8,1024], index: 0, kind: input, shape index: {}]
  %s1 = inlined_call_operand.hbm [shape: bf16[1024,128], index: 1, kind: input, shape index: {}]
  %s2 = inlined_call_operand.vmem [shape: f32[1,128], index: 2, kind: input, shape index: {}]
  %s3 = inlined_call_operand.hbm [shape: bf16[128,128], index: 3, kind: input, shape index: {}]
  %s4 = inlined_call_operand.vmem [shape: f32[1,128], index: 4, kind: input, shape index: {}]
  %s5 = inlined_call_operand.hbm [shape: f32[8,128], index: 5, kind: output, shape index: {}]
  %s6 = sld [smem:[#allocation0]]
  $region73: #{tpu_custom_call.1} parent=0
    _
  %s8 = ssub.s32 1, %s6
  %s9 = scalar_select 0, %s8, %s6
  $region1: #{tpu_custom_call.1} parent=0
    #allocation3 [shape = 'u8[8192]{0}', space=vmem, size = 0x2000, scoped, tag = 'input window, operand 0']
    #allocation4 [shape = 's32[2]{0}', space=sflag, size = 0x8, scoped, tag = 'scoped memory for tpu_custom_call.1']
    #allocation5 [shape = 's32[2]{0}', space=sflag, size = 0x8, scoped, tag = 'scoped memory for tpu_custom_call.1']
    #allocation6 [shape = 'u8[131072]{0}', space=vmem, size = 0x20000, scoped, tag = 'input window, operand 1']
    #allocation7 [shape = 's32[2]{0}', space=sflag, size = 0x8, scoped, tag = 'scoped memory for tpu_custom_call.1']
    #allocation8 [shape = 'u8[32768]{0}', space=vmem, size = 0x8000, scoped, tag = 'input window, operand 3, single buffered']
    #allocation9 [shape = 'u8[4096]{0}', space=vmem, size = 0x1000, scoped, tag = 'output window, operand 0, single buffered']
    %10 = vsyncpa [#allocation4], 0
    %s11 = scalar_lea.sflag [#allocation4], 1
    %12 = vsyncpa %s11, 0
    %13 = vsyncpa [#allocation7], 0
    %s14 = scalar_lea.sflag [#allocation7], 1
    %15 = vsyncpa %s14, 0
    %16 = vsyncpa [#allocation5], 0
    loop: start=0, step=1, limit=6
    $region2: #{tpu_custom_call.1} parent=1 // loop_pre_header
      _
    $region3: #{tpu_custom_call.1} parent=1 // loop_header
      %s18 = sphi 0, %s22
      %p19 = scmp.ge.s32.totalorder %s18, 6
      %s25 = sphi 0, %s37
      %s26 = sphi 0, %s33
      %s27 = sphi 0, %s25
      %s28 = sphi 0, %s26
      %s29 = sphi 0, %s27
      %s30 = sphi 0, %s28
      %s42 = sphi 0, %s44
      %s45 = sphi 0, %s42
      %s46 = sphi 0, %s45
      %s62 = sphi 0, %s46
      %s68 = sphi 0, %s70
      %s71 = sphi 0, %s68
      %s72 = sphi 0, %s71
      %s88 = sphi 0, %s72
      %s92 = sphi 0, %s92
      %s94 = sphi 0, %s92
      %s95 = sphi 0, %s94
      %s109 = sphi 0, %s95
      %s113 = sphi 0, %s113
      %s115 = sphi 0, %s113
      %s116 = sphi 0, %s115
      %s130 = sphi 0, %s116
      %s134 = sphi 0, %s134
      %s136 = sphi 0, %s134
      %s137 = sphi 0, %s136
      %s151 = sphi 0, %s137
      %s157 = sphi 0, %s159
      %s160 = sphi 0, %s157
      %s161 = sphi 0, %s160
      %s177 = sphi 0, %s161
    $region4: #{tpu_custom_call.1} parent=1 // loop_header_branch
      %21 = sbr.rel (%p19) target = $region8
    $region5: #{tpu_custom_call.1} parent=1 // loop_body
      %s23 = ssub.s32 %s18, 1
      %s24 = ssub.s32 %s18, 2
      %s31 = sadd.s32 1, %s26
      %p32 = scmp.ge.s32.totalorder %s31, 4
      %s33 = scalar_select %p32, 0, %s31
      %s34 = sadd.s32 1, %s25
      %s35 = scalar_select %p32, %s34, %s25
      %p36 = scmp.ge.s32.totalorder %s35, 1
      %s37 = scalar_select %p36, 0, %s35
      %s38 = ssub.s32 %s25, %s37
      %s39 = ssub.s32 %s26, %s33
      %s40 = sor.u32 %s38, %s39
      %p41 = scmp.eq.s32.totalorder %s40, 0
      %s43 = sadd.s32 %s42, 1
      %s44 = scalar_select %p41, %s42, %s43
      %p47 = pneg %p41
      %p48 = scmp.eq.s32.totalorder %s18, 3
      %p49 = por %p47, %p48
      %p50 = scmp.ne.s32.totalorder %s42, %s45
      %p51 = scmp.eq.s32.totalorder %s18, 0
      %p52 = por %p50, %p51
      %p53 = scmp.ne.s32.totalorder %s42, %s45
      %p54 = scmp.eq.s32.totalorder %s23, 3
      %p55 = por %p53, %p54
      %p56 = scmp.ne.s32.totalorder %s45, %s46
      %p57 = scmp.eq.s32.totalorder %s23, 0
      %p58 = por %p56, %p57
      %p59 = scmp.ne.s32.totalorder %s45, %s46
      %p60 = scmp.eq.s32.totalorder %s24, 3
      %p61 = por %p59, %p60
      %p63 = scmp.ne.s32.totalorder %s46, %s62
      %p64 = scmp.eq.s32.totalorder %s24, 0
      %p65 = por %p63, %p64
      %s66 = ssub.s32 %s26, %s33
      %p67 = scmp.eq.s32.totalorder %s66, 0
      %s69 = sadd.s32 %s68, 1
      %s70 = scalar_select %p67, %s68, %s69
      %p73 = pneg %p67
      %p74 = scmp.eq.s32.totalorder %s18, 3
      %p75 = por %p73, %p74
      %p76 = scmp.ne.s32.totalorder %s68, %s71
      %p77 = scmp.eq.s32.totalorder %s18, 0
      %p78 = por %p76, %p77
      %p79 = scmp.ne.s32.totalorder %s68, %s71
      %p80 = scmp.eq.s32.totalorder %s23, 3
      %p81 = por %p79, %p80
      %p82 = scmp.ne.s32.totalorder %s71, %s72
      %p83 = scmp.eq.s32.totalorder %s23, 0
      %p84 = por %p82, %p83
      %p85 = scmp.ne.s32.totalorder %s71, %s72
      %p86 = scmp.eq.s32.totalorder %s24, 3
      %p87 = por %p85, %p86
      %p89 = scmp.ne.s32.totalorder %s72, %s88
      %p90 = scmp.eq.s32.totalorder %s24, 0
      %p91 = por %p89, %p90
      %s93 = sadd.s32 %s92, 1
      %p96 = scmp.eq.s32.totalorder %s18, 3
      %p97 = scmp.ne.s32.totalorder %s92, %s94
      %p98 = scmp.eq.s32.totalorder %s18, 0
      %p99 = por %p97, %p98
      %p100 = scmp.ne.s32.totalorder %s92, %s94
      %p101 = scmp.eq.s32.totalorder %s23, 3
      %p102 = por %p100, %p101
      %p103 = scmp.ne.s32.totalorder %s94, %s95
      %p104 = scmp.eq.s32.totalorder %s23, 0
      %p105 = por %p103, %p104
      %p106 = scmp.ne.s32.totalorder %s94, %s95
      %p107 = scmp.eq.s32.totalorder %s24, 3
      %p108 = por %p106, %p107
      %p110 = scmp.ne.s32.totalorder %s95, %s109
      %p111 = scmp.eq.s32.totalorder %s24, 0
      %p112 = por %p110, %p111
      %s114 = sadd.s32 %s113, 1
      %p117 = scmp.eq.s32.totalorder %s18, 3
      %p118 = scmp.ne.s32.totalorder %s113, %s115
      %p119 = scmp.eq.s32.totalorder %s18, 0
      %p120 = por %p118, %p119
      %p121 = scmp.ne.s32.totalorder %s113, %s115
      %p122 = scmp.eq.s32.totalorder %s23, 3
      %p123 = por %p121, %p122
      %p124 = scmp.ne.s32.totalorder %s115, %s116
      %p125 = scmp.eq.s32.totalorder %s23, 0
      %p126 = por %p124, %p125
      %p127 = scmp.ne.s32.totalorder %s115, %s116
      %p128 = scmp.eq.s32.totalorder %s24, 3
      %p129 = por %p127, %p128
      %p131 = scmp.ne.s32.totalorder %s116, %s130
      %p132 = scmp.eq.s32.totalorder %s24, 0
      %p133 = por %p131, %p132
      %s135 = sadd.s32 %s134, 1
      %p138 = scmp.eq.s32.totalorder %s18, 3
      %p139 = scmp.ne.s32.totalorder %s134, %s136
      %p140 = scmp.eq.s32.totalorder %s18, 0
      %p141 = por %p139, %p140
      %p142 = scmp.ne.s32.totalorder %s134, %s136
      %p143 = scmp.eq.s32.totalorder %s23, 3
      %p144 = por %p142, %p143
      %p145 = scmp.ne.s32.totalorder %s136, %s137
      %p146 = scmp.eq.s32.totalorder %s23, 0
      %p147 = por %p145, %p146
      %p148 = scmp.ne.s32.totalorder %s136, %s137
      %p149 = scmp.eq.s32.totalorder %s24, 3
      %p150 = por %p148, %p149
      %p152 = scmp.ne.s32.totalorder %s137, %s151
      %p153 = scmp.eq.s32.totalorder %s24, 0
      %p154 = por %p152, %p153
      %s155 = ssub.s32 %s25, %s37
      %p156 = scmp.eq.s32.totalorder %s155, 0
      %s158 = sadd.s32 %s157, 1
      %s159 = scalar_select %p156, %s157, %s158
      %p162 = pneg %p156
      %p163 = scmp.eq.s32.totalorder %s18, 3
      %p164 = por %p162, %p163
      %p165 = scmp.ne.s32.totalorder %s157, %s160
      %p166 = scmp.eq.s32.totalorder %s18, 0
      %p167 = por %p165, %p166
      %p168 = scmp.ne.s32.totalorder %s157, %s160
      %p169 = scmp.eq.s32.totalorder %s23, 3
      %p170 = por %p168, %p169
      %p171 = scmp.ne.s32.totalorder %s160, %s161
      %p172 = scmp.eq.s32.totalorder %s23, 0
      %p173 = por %p171, %p172
      %p174 = scmp.ne.s32.totalorder %s160, %s161
      %p175 = scmp.eq.s32.totalorder %s24, 3
      %p176 = por %p174, %p175
      %p178 = scmp.ne.s32.totalorder %s161, %s177
      %p179 = scmp.eq.s32.totalorder %s24, 0
      %p180 = por %p178, %p179
      %p181 = scmp.le.s32.totalorder 1, %s18
      %p182 = scmp.lt.s32.totalorder %s18, 5
      %p183 = pnand %p181, %p182
      %p184 = pneg %p183
      // Predicated region
      $region9: #{tpu_custom_call.1} parent=5 // pred_check
        _
      $region10: #{tpu_custom_call.1} parent=5 // pred_check_branch
        %186 = sbr.rel (%p183) target = $region12
      $region11: #{tpu_custom_call.1} parent=5 // pred_region
        %s187 = ssub.s32 %s18, 1
        // Predicated region
        $region13: #{tpu_custom_call.1} parent=11 // pred_check
          %p188 = pneg %p105
        $region14: #{tpu_custom_call.1} parent=11 // pred_check_branch
          %190 = sbr.rel (%p188) target = $region16
        $region15: #{tpu_custom_call.1} parent=11 // pred_region
          _
        $region16: #{tpu_custom_call.1} parent=11 // pred_fallthru
          _
        // Predicated region
        $region17: #{tpu_custom_call.1} parent=11 // pred_check
          %p191 = pneg %p126
        $region18: #{tpu_custom_call.1} parent=11 // pred_check_branch
          %193 = sbr.rel (%p191) target = $region20
        $region19: #{tpu_custom_call.1} parent=11 // pred_region
          %195 = vsyncadd [#allocation7], 0
          %s196 = sshll.u32 %s3, 4
          %s197 = int_to_ptr.hbm [resolvable:$true] %s196
          %s198 = sshll.u32 [#allocation8], 4
          %s199 = int_to_ptr.vmem [resolvable:$true] %s198
          %204 = dma.hbm_to_vmem [thread:$0]  %s197, 1024, %s199, [#allocation7], 64, 64, 4
        $region20: #{tpu_custom_call.1} parent=11 // pred_fallthru
          _
        // Predicated region
        $region21: #{tpu_custom_call.1} parent=11 // pred_check
          %p205 = pneg %p147
        $region22: #{tpu_custom_call.1} parent=11 // pred_check_branch
          %207 = sbr.rel (%p205) target = $region24
        $region23: #{tpu_custom_call.1} parent=11 // pred_region
          _
        $region24: #{tpu_custom_call.1} parent=11 // pred_fallthru
          _
      $region12: #{tpu_custom_call.1} parent=5 // pred_fallthru
        _
      %p208 = scmp.lt.s32.totalorder %s18, 4
      // Predicated region
      $region25: #{tpu_custom_call.1} parent=5 // pred_check
        %p209 = pneg %p208
      $region26: #{tpu_custom_call.1} parent=5 // pred_check_branch
        %211 = sbr.rel (%p209) target = $region28
      $region27: #{tpu_custom_call.1} parent=5 // pred_region
        // Predicated region
        $region29: #{tpu_custom_call.1} parent=27 // pred_check
          %p212 = pneg %p52
        $region30: #{tpu_custom_call.1} parent=27 // pred_check_branch
          %214 = sbr.rel (%p212) target = $region32
        $region31: #{tpu_custom_call.1} parent=27 // pred_region
          %s215 = sand.u32 %s42, 1
          %s216 = scalar_lea.sflag [#allocation4], %s215
          %s217 = sand.u32 %s42, 1
          %s218 = smul.addr %s217, 8
          %s219 = scalar_lea.vmem [#allocation3], %s218
          %s220 = smul.u32 2, %s26
          %222 = vsyncadd %s216, 0
          %s223 = smul.addr %s25, 8
          %s224 = sadd.s32 %s220, %s223
          %s225 = smul.addr %s224, 4
          %s226 = scalar_lea.hbm %s0, %s225
          %s228 = sshll.u32 %s226, 4
          %s229 = int_to_ptr.hbm [resolvable:$true] %s228
          %s230 = sshll.u32 %s219, 4
          %s231 = int_to_ptr.vmem [resolvable:$true] %s230
          %233 = dma.hbm_to_vmem [thread:$0]  %s229, 128, %s231, %s216
        $region32: #{tpu_custom_call.1} parent=27 // pred_fallthru
          _
        // Predicated region
        $region33: #{tpu_custom_call.1} parent=27 // pred_check
          %p234 = pneg %p78
        $region34: #{tpu_custom_call.1} parent=27 // pred_check_branch
          %236 = sbr.rel (%p234) target = $region36
        $region35: #{tpu_custom_call.1} parent=27 // pred_region
          %s237 = sand.u32 %s18, 1
          %s238 = scalar_lea.sflag [#allocation7], %s237
          %s239 = sand.u32 %s68, 1
          %s240 = smul.addr %s239, 128
          %s241 = scalar_lea.vmem [#allocation6], %s240
          %s242 = smul.u32 32, %s26
          %244 = vsyncadd %s238, 0
          %s245 = smul.addr %s242, 4
          %s246 = scalar_lea.hbm %s1, %s245
          %s247 = sshll.u32 %s246, 4
          %s248 = int_to_ptr.hbm [resolvable:$true] %s247
          %s249 = sshll.u32 %s241, 4
          %s250 = int_to_ptr.vmem [resolvable:$true] %s249
          %255 = dma.hbm_to_vmem [thread:$0]  %s248, 2048, %s250, %s238, 64, 64, 4
        $region36: #{tpu_custom_call.1} parent=27 // pred_fallthru
          _
      $region28: #{tpu_custom_call.1} parent=5 // pred_fallthru
        _
      %p256 = scmp.le.s32.totalorder 1, %s18
      %p257 = scmp.lt.s32.totalorder %s18, 5
      %p258 = pnand %p256, %p257
      %p259 = pneg %p258
      // Predicated region
      $region37: #{tpu_custom_call.1} parent=5 // pred_check
        _
      $region38: #{tpu_custom_call.1} parent=5 // pred_check_branch
        %261 = sbr.rel (%p258) target = $region40
      $region39: #{tpu_custom_call.1} parent=5 // pred_region
        %s262 = ssub.s32 %s18, 1
        %s263 = sand.u32 %s45, 1
        %s264 = scalar_lea.sflag [#allocation4], %s263
        %s265 = sand.u32 %s45, 1
        %s266 = smul.addr %s265, 8
        %s267 = scalar_lea.vmem [#allocation3], %s266
        // Predicated region
        $region41: #{tpu_custom_call.1} parent=39 // pred_check
          %p268 = pneg %p58
        $region42: #{tpu_custom_call.1} parent=39 // pred_check_branch
          %270 = sbr.rel (%p268) target = $region44
        $region43: #{tpu_custom_call.1} parent=39 // pred_region
          %272 = dma.done %s264, 128
        $region44: #{tpu_custom_call.1} parent=39 // pred_fallthru
          _
        %s273 = sand.u32 %s23, 1
        %s274 = scalar_lea.sflag [#allocation7], %s273
        %s275 = sand.u32 %s71, 1
        %s276 = smul.addr %s275, 128
        %s277 = scalar_lea.vmem [#allocation6], %s276
        // Predicated region
        $region45: #{tpu_custom_call.1} parent=39 // pred_check
          %p278 = pneg %p84
        $region46: #{tpu_custom_call.1} parent=39 // pred_check_branch
          %280 = sbr.rel (%p278) target = $region48
        $region47: #{tpu_custom_call.1} parent=39 // pred_region
          %282 = dma.done %s274, 2048
        $region48: #{tpu_custom_call.1} parent=39 // pred_fallthru
          _
        // Predicated region
        $region49: #{tpu_custom_call.1} parent=39 // pred_check
          %p283 = pneg %p126
        $region50: #{tpu_custom_call.1} parent=39 // pred_check_branch
          %285 = sbr.rel (%p283) target = $region52
        $region51: #{tpu_custom_call.1} parent=39 // pred_region
          %287 = dma.done [#allocation7], 1024
        $region52: #{tpu_custom_call.1} parent=39 // pred_fallthru
          _
        %s288 = sand.u32 %s45, 1
        %s289 = scalar_lea.sflag [#allocation4], %s288
        %s290 = sand.u32 %s45, 1
        %s291 = smul.addr %s290, 8
        %s292 = scalar_lea.vmem [#allocation3], %s291
        %p293 = pneg %p58
        %p294 = pneg %p55
        %s295 = sand.u32 %s23, 1
        %s296 = scalar_lea.sflag [#allocation7], %s295
        %s297 = sand.u32 %s71, 1
        %s298 = smul.addr %s297, 128
        %s299 = scalar_lea.vmem [#allocation6], %s298
        %p300 = pneg %p84
        %p301 = pneg %p81
        %p302 = pneg %p105
        %p303 = pneg %p102
        %p304 = pneg %p126
        %p305 = pneg %p123
        %p306 = pneg %p147
        %p307 = pneg %p144
        %p308 = pneg %p173
        %p309 = pneg %p170
        %s310 = smul.u32 2, %s28
        %s311 = smul.u32 32, %s28
        %p312 = scmp.eq.s32.totalorder %s28, 0
        // Predicated region
        $region53: #{tpu_custom_call.1} parent=39 // pred_check
          %p313 = pneg %p312
        $region54: #{tpu_custom_call.1} parent=39 // pred_check_branch
          %315 = sbr.rel (%p313) target = $region56
        $region55: #{tpu_custom_call.1} parent=39 // pred_region
          %316 = vst [vmem:[#allocation2] sm:$0xff] 0.0
        $region56: #{tpu_custom_call.1} parent=39 // pred_fallthru
          _
        %v317 = vld [vmem:[#allocation2] sm:$0xff]
        %v318 = vld [vmem:[%s267] sm:$0xff]
        %v319 = vld [vmem:[%s277] sm:$0xf]
        %v320 = vld [vmem:[%s277 + $0x4] sm:$0xf]
        %v321 = vld [vmem:[%s277 + $0x8] sm:$0xf]
        %v322 = vld [vmem:[%s277 + $0xc] sm:$0xf]
        %v323 = vld [vmem:[%s277 + $0x10] sm:$0xf]
        %v324 = vld [vmem:[%s277 + $0x14] sm:$0xf]
        %v325 = vld [vmem:[%s277 + $0x18] sm:$0xf]
        %v326 = vld [vmem:[%s277 + $0x1c] sm:$0xf]
        %v327 = vld [vmem:[%s277 + $0x20] sm:$0xf]
        %v328 = vld [vmem:[%s277 + $0x24] sm:$0xf]
        %v329 = vld [vmem:[%s277 + $0x28] sm:$0xf]
        %v330 = vld [vmem:[%s277 + $0x2c] sm:$0xf]
        %v331 = vld [vmem:[%s277 + $0x30] sm:$0xf]
        %v332 = vld [vmem:[%s277 + $0x34] sm:$0xf]
        %v333 = vld [vmem:[%s277 + $0x38] sm:$0xf]
        %v334 = vld [vmem:[%s277 + $0x3c] sm:$0xf]
        %v335 = vld [vmem:[%s277 + $0x40] sm:$0xf]
        %v336 = vld [vmem:[%s277 + $0x44] sm:$0xf]
        %v337 = vld [vmem:[%s277 + $0x48] sm:$0xf]
        %v338 = vld [vmem:[%s277 + $0x4c] sm:$0xf]
        %v339 = vld [vmem:[%s277 + $0x50] sm:$0xf]
        %v340 = vld [vmem:[%s277 + $0x54] sm:$0xf]
        %v341 = vld [vmem:[%s277 + $0x58] sm:$0xf]
        %v342 = vld [vmem:[%s277 + $0x5c] sm:$0xf]
        %v343 = vld [vmem:[%s277 + $0x60] sm:$0xf]
        %v344 = vld [vmem:[%s277 + $0x64] sm:$0xf]
        %v345 = vld [vmem:[%s277 + $0x68] sm:$0xf]
        %v346 = vld [vmem:[%s277 + $0x6c] sm:$0xf]
        %v347 = vld [vmem:[%s277 + $0x70] sm:$0xf]
        %v348 = vld [vmem:[%s277 + $0x74] sm:$0xf]
        %v349 = vld [vmem:[%s277 + $0x78] sm:$0xf]
        %v350 = vld [vmem:[%s277 + $0x7c] sm:$0xf]
        %v352 = vunpack.c.l.b16 %v318
        %v353 = vunpack.c.h.b16 %v318
        %v354 = vpack.c.b16 %v352, %v352
        %v355 = vpack.c.b16 %v353, %v353
        %v390 = vunpack.c.l.b16 %v319
        %v391 = vunpack.c.l.b16 %v320
        %v392 = vunpack.c.l.b16 %v321
        %v393 = vunpack.c.l.b16 %v322
        %v394 = vunpack.c.l.b16 %v323
        %v395 = vunpack.c.l.b16 %v324
        %v396 = vunpack.c.l.b16 %v325
        %v397 = vunpack.c.l.b16 %v326
        %v398 = vunpack.c.l.b16 %v327
        %v399 = vunpack.c.l.b16 %v328
        %v400 = vunpack.c.l.b16 %v329
        %v401 = vunpack.c.l.b16 %v330
        %v402 = vunpack.c.l.b16 %v331
        %v403 = vunpack.c.l.b16 %v332
        %v404 = vunpack.c.l.b16 %v333
        %v405 = vunpack.c.l.b16 %v334
        %v406 = vunpack.c.l.b16 %v335
        %v407 = vunpack.c.l.b16 %v336
        %v408 = vunpack.c.l.b16 %v337
        %v409 = vunpack.c.l.b16 %v338
        %v410 = vunpack.c.l.b16 %v339
        %v411 = vunpack.c.l.b16 %v340
        %v412 = vunpack.c.l.b16 %v341
        %v413 = vunpack.c.l.b16 %v342
        %v414 = vunpack.c.l.b16 %v343
        %v415 = vunpack.c.l.b16 %v344
        %v416 = vunpack.c.l.b16 %v345
        %v417 = vunpack.c.l.b16 %v346
        %v418 = vunpack.c.l.b16 %v347
        %v419 = vunpack.c.l.b16 %v348
        %v420 = vunpack.c.l.b16 %v349
        %v421 = vunpack.c.l.b16 %v350
        %v422 = vpack.c.b16 %v391, %v390
        %v423 = vpack.c.b16 %v393, %v392
        %v424 = vpack.c.b16 %v395, %v394
        %v425 = vpack.c.b16 %v397, %v396
        %v426 = vpack.c.b16 %v399, %v398
        %v427 = vpack.c.b16 %v401, %v400
        %v428 = vpack.c.b16 %v403, %v402
        %v429 = vpack.c.b16 %v405, %v404
        %v430 = vpack.c.b16 %v407, %v406
        %v431 = vpack.c.b16 %v409, %v408
        %v432 = vpack.c.b16 %v411, %v410
        %v433 = vpack.c.b16 %v413, %v412
        %v434 = vpack.c.b16 %v415, %v414
        %v435 = vpack.c.b16 %v417, %v416
        %v436 = vpack.c.b16 %v419, %v418
        %v437 = vpack.c.b16 %v421, %v420
        %454 = vmatpush.bf16.msra.mxu0 %v429
        %455 = vmatpush.bf16.msra.mxu0 %v428
        %456 = vmatpush.bf16.msra.mxu0 %v427
        %457 = vmatpush.bf16.msra.mxu0 %v426
        %458 = vmatpush.bf16.msra.mxu0 %v425
        %459 = vmatpush.bf16.msra.mxu0 %v424
        %460 = vmatpush.bf16.msra.mxu0 %v423
        %461 = vmatpush.bf16.msra.mxu0 %v422
        %462 = vmatmul.bf16.gmra.mxu0 %v354
        %v463 = vpop.f32.mrf.mxu0
        %v464 = vadd.f32 0.0, %v463
        %v465 = vpop.f32.mrf.mxu0
        %466 = vdwg.mxu0
        %467 = vmatpush.bf16.msra.mxu0 %v437
        %468 = vmatpush.bf16.msra.mxu0 %v436
        %469 = vmatpush.bf16.msra.mxu0 %v435
        %470 = vmatpush.bf16.msra.mxu0 %v434
        %471 = vmatpush.bf16.msra.mxu0 %v433
        %472 = vmatpush.bf16.msra.mxu0 %v432
        %473 = vmatpush.bf16.msra.mxu0 %v431
        %474 = vmatpush.bf16.msra.mxu0 %v430
        %475 = vmatmul.bf16.gmra.mxu0 %v355
        %v476 = vpop.f32.mrf.mxu0
        %v477 = vadd.f32 %v464, %v476
        %v478 = vpop.f32.mrf.mxu0
        %479 = vdwg.mxu0
        %v480 = vadd.f32 %v317, %v477
        %481 = vst [vmem:[#allocation2] sm:$0xff] %v480
        %p482 = scmp.eq.s32.totalorder %s28, 3
        // Predicated region
        $region57: #{tpu_custom_call.1} parent=39 // pred_check
          %p483 = pneg %p482
        $region58: #{tpu_custom_call.1} parent=39 // pred_check_branch
          %485 = sbr.rel (%p483) target = $region60
        $region59: #{tpu_custom_call.1} parent=39 // pred_region
          %v486 = vld [vmem:[#allocation2] sm:$0xff]
          %v487 = vld [vmem:[%s2] sm:$0x1]
          %v489 = vperm.slane %v487, 0
          %v491 = vadd.f32 %v486, %v489
          %v492 = vmax.f32 %v491, 0.0
          %v493 = vpack.c.bf16 %v492, %v492
          %v494 = vld [vmem:[#allocation8] sm:$0xf]
          %v495 = vld [vmem:[#allocation8 + $0x4] sm:$0xf]
          %v496 = vld [vmem:[#allocation8 + $0x8] sm:$0xf]
          %v497 = vld [vmem:[#allocation8 + $0xc] sm:$0xf]
          %v498 = vld [vmem:[#allocation8 + $0x10] sm:$0xf]
          %v499 = vld [vmem:[#allocation8 + $0x14] sm:$0xf]
          %v500 = vld [vmem:[#allocation8 + $0x18] sm:$0xf]
          %v501 = vld [vmem:[#allocation8 + $0x1c] sm:$0xf]
          %v502 = vld [vmem:[#allocation8 + $0x20] sm:$0xf]
          %v503 = vld [vmem:[#allocation8 + $0x24] sm:$0xf]
          %v504 = vld [vmem:[#allocation8 + $0x28] sm:$0xf]
          %v505 = vld [vmem:[#allocation8 + $0x2c] sm:$0xf]
          %v506 = vld [vmem:[#allocation8 + $0x30] sm:$0xf]
          %v507 = vld [vmem:[#allocation8 + $0x34] sm:$0xf]
          %v508 = vld [vmem:[#allocation8 + $0x38] sm:$0xf]
          %v509 = vld [vmem:[#allocation8 + $0x3c] sm:$0xf]
          %v510 = vld [vmem:[%s4] sm:$0x1]
          %v512 = vperm.slane %v510, 0
          %v530 = vunpack.c.l.b16 %v494
          %v531 = vunpack.c.l.b16 %v495
          %v532 = vunpack.c.l.b16 %v496
          %v533 = vunpack.c.l.b16 %v497
          %v534 = vunpack.c.l.b16 %v498
          %v535 = vunpack.c.l.b16 %v499
          %v536 = vunpack.c.l.b16 %v500
          %v537 = vunpack.c.l.b16 %v501
          %v538 = vunpack.c.l.b16 %v502
          %v539 = vunpack.c.l.b16 %v503
          %v540 = vunpack.c.l.b16 %v504
          %v541 = vunpack.c.l.b16 %v505
          %v542 = vunpack.c.l.b16 %v506
          %v543 = vunpack.c.l.b16 %v507
          %v544 = vunpack.c.l.b16 %v508
          %v545 = vunpack.c.l.b16 %v509
          %v546 = vpack.c.b16 %v531, %v530
          %v547 = vpack.c.b16 %v533, %v532
          %v548 = vpack.c.b16 %v535, %v534
          %v549 = vpack.c.b16 %v537, %v536
          %v550 = vpack.c.b16 %v539, %v538
          %v551 = vpack.c.b16 %v541, %v540
          %v552 = vpack.c.b16 %v543, %v542
          %v553 = vpack.c.b16 %v545, %v544
          %562 = vmatpush.bf16.msra.mxu0 %v553
          %563 = vmatpush.bf16.msra.mxu0 %v552
          %564 = vmatpush.bf16.msra.mxu0 %v551
          %565 = vmatpush.bf16.msra.mxu0 %v550
          %566 = vmatpush.bf16.msra.mxu0 %v549
          %567 = vmatpush.bf16.msra.mxu0 %v548
          %568 = vmatpush.bf16.msra.mxu0 %v547
          %569 = vmatpush.bf16.msra.mxu0 %v546
          %570 = vmatmul.bf16.gmra.mxu0 %v493
          %v571 = vpop.f32.mrf.mxu0
          %v572 = vadd.f32 %v512, %v571
          %v573 = vpop.f32.mrf.mxu0
          %574 = vdwg.mxu0
          %575 = vst [vmem:[#allocation9] sm:$0xff] %v572
        $region60: #{tpu_custom_call.1} parent=39 // pred_fallthru
          _
        // Predicated region
        $region61: #{tpu_custom_call.1} parent=39 // pred_check
          %p576 = pneg %p170
        $region62: #{tpu_custom_call.1} parent=39 // pred_check_branch
          %578 = sbr.rel (%p576) target = $region64
        $region63: #{tpu_custom_call.1} parent=39 // pred_region
          %580 = vsyncadd [#allocation5], 0
          %s581 = smul.addr %s27, 8
          %s582 = scalar_lea.hbm %s5, %s581
          %s584 = sshll.u32 [#allocation9], 4
          %s585 = int_to_ptr.vmem [resolvable:$true] %s584
          %s586 = sshll.u32 %s582, 4
          %s587 = int_to_ptr.hbm [resolvable:$true] %s586
          %589 = dma.vmem_to_hbm [thread:$0]  %s585, 128, %s587, [#allocation5]
        $region64: #{tpu_custom_call.1} parent=39 // pred_fallthru
          _
        // Predicated region
        $region65: #{tpu_custom_call.1} parent=39 // pred_check
          %p590 = pneg %p170
        $region66: #{tpu_custom_call.1} parent=39 // pred_check_branch
          %592 = sbr.rel (%p590) target = $region68
        $region67: #{tpu_custom_call.1} parent=39 // pred_region
          %594 = dma.done [#allocation5], 128
        $region68: #{tpu_custom_call.1} parent=39 // pred_fallthru
          _
      $region40: #{tpu_custom_call.1} parent=5 // pred_fallthru
        _
      %p595 = scmp.le.s32.totalorder 2, %s18
      // Predicated region
      $region69: #{tpu_custom_call.1} parent=5 // pred_check
        %p596 = pneg %p595
      $region70: #{tpu_custom_call.1} parent=5 // pred_check_branch
        %598 = sbr.rel (%p596) target = $region72
      $region71: #{tpu_custom_call.1} parent=5 // pred_region
        %s599 = ssub.s32 %s18, 2
      $region72: #{tpu_custom_call.1} parent=5 // pred_fallthru
        _
    $region6: #{tpu_custom_call.1} parent=1 // loop_footer
      %s22 = sadd.s32 1, %s18
    $region7: #{tpu_custom_call.1} parent=1 // loop_footer_branch
      %17 = sbr.rel target = $region3
    $region8: #{tpu_custom_call.1} parent=1 // loop_exit
      _
    %600 = vsyncpa [#allocation4], 1
    %s601 = scalar_lea.sflag [#allocation4], 1
    %602 = vsyncpa %s601, 1
    %603 = vsyncpa [#allocation7], 1
    %s604 = scalar_lea.sflag [#allocation7], 1
    %605 = vsyncpa %s604, 1
    %606 = vsyncpa [#allocation5], 1
    %s607 = scalar_lea.sflag [#allocation5], 1
    %608 = vsyncpa %s607, 1

</llo_original>
